<compile_context>
chip_gen: v6e
topology: v6e:2x2x1
jax: 0.10.0
libtpu: 0.0.40
codegen_flags: <defaults>
</compile_context>

<pallas_src>
import numpy as np
import jax
import jax.numpy as jnp
from jax.experimental import pallas as pl
from jax.experimental.pallas import tpu as pltpu


def _bnet_kernel(x_ref, w_ref, sb_ref, o_ref):
    # x_ref : (1, H, W*C)                  one batch element, lane-dense
    # w_ref : (num_blocks, 2, 3*W*C, W*C)  block-banded im2row conv weights
    # sb_ref: (num_blocks, 2, 2, W*C)      [scale; bias] folded BN (+conv bias)
    # o_ref : (1, H, W*C)
    _, H, WC = x_ref.shape
    num_blocks = w_ref.shape[0]
    zero_row = jnp.zeros((1, WC), jnp.float32)

    def conv_bn(act, b, j):
        # H-shifted taps: zero rows supply the H zero-padding; the W padding is
        # implicit in the banded weight (out-of-range W taps simply have no
        # nonzero band entries).
        up = jnp.concatenate([zero_row, act[:H - 1, :]], axis=0)   # act[h-1]
        dn = jnp.concatenate([act[1:, :], zero_row], axis=0)       # act[h+1]
        taps = jnp.concatenate([up, act, dn], axis=-1)             # (H, 3*WC)
        y = jnp.dot(taps, w_ref[b, j], preferred_element_type=jnp.float32)
        sb = sb_ref[b, j]                                          # (2, WC)
        return y * sb[0:1, :] + sb[1:2, :]

    cur = x_ref[0].astype(jnp.float32)                             # (H, WC)
    for b in range(num_blocks):   # all residual blocks fused, activation on-chip
        h = jnp.maximum(conv_bn(cur, b, 0), 0.0)       # conv1 + BN1 + ReLU
        cur = jnp.maximum(conv_bn(h, b, 1) + cur, 0.0)  # conv2 + BN2 + res + ReLU
    o_ref[0] = cur.astype(o_ref.dtype)


def bnet_forward(x_nchw, w_all, sb_all, bg_planes):
    """BNet forward: fused residual stack, then channel split (NCHW in/out)."""
    N, C, H, W = x_nchw.shape
    WC = W * C
    num_blocks = w_all.shape[0]
    x = jnp.transpose(x_nchw, (0, 2, 3, 1)).reshape(N, H, WC)  # NCHW -> (N,H,W*C)
    out = pl.pallas_call(
        _bnet_kernel,
        out_shape=jax.ShapeDtypeStruct((N, H, WC), x.dtype),
        grid=(N,),
        in_specs=[
            pl.BlockSpec((1, H, WC), lambda n: (n, 0, 0)),
            pl.BlockSpec((num_blocks, 2, 3 * WC, WC), lambda n: (0, 0, 0, 0)),
            pl.BlockSpec((num_blocks, 2, 2, WC), lambda n: (0, 0, 0, 0)),
        ],
        out_specs=pl.BlockSpec((1, H, WC), lambda n: (n, 0, 0)),
        compiler_params=pltpu.CompilerParams(
            dimension_semantics=("parallel",)),
    )(x, w_all, sb_all)
    out = jnp.transpose(out.reshape(N, H, W, C), (0, 3, 1, 2))  # -> NCHW
    return out[:, :bg_planes], out[:, bg_planes:]


def _banded_conv_weight(w_hwio, width):
    """Fold W-taps + channel mixing of a 3x3 conv into a (3*W*C, W*C) banded matrix.

    M[dh*W*C + w_in*C + cin, w_out*C + cout] = w_hwio[dh, w_in - w_out + 1, cin, cout]
    when |w_in - w_out| <= 1 else 0 (implicit zero W-padding)."""
    _, _, cin, cout = w_hwio.shape
    C = cin
    WC = width * C
    M = np.zeros((3, WC, WC), np.float32)
    for dh in range(3):
        for w_out in range(width):
            for dw in range(3):
                w_in = w_out + dw - 1
                if 0 <= w_in < width:
                    M[dh, w_in * C:(w_in + 1) * C,
                      w_out * C:(w_out + 1) * C] = w_hwio[dh, dw]
    return M.reshape(3 * WC, WC)


def make_bnet_params(key, planes, num_blocks, width):
    """Deterministic conv + BN params; BN folded (eval mode) and conv weights
    repacked into the lane-dense banded form the kernel expects."""
    C = planes
    WC = width * C
    eps = 1e-5
    w_all = np.zeros((num_blocks, 2, 3 * WC, WC), np.float32)
    sb_all = np.zeros((num_blocks, 2, 2, WC), np.float32)
    raw = []
    for b in range(num_blocks):
        blk = []
        for j in range(2):  # two conv+BN pairs per BasicResBlock
            key, k1, k2, k3, k4, k5, k6 = jax.random.split(key, 7)
            w_pt = jax.random.normal(k1, (C, C, 3, 3), jnp.float32) * 0.1  # OIHW
            conv_b = jax.random.normal(k2, (C,), jnp.float32) * 0.1
            gamma = 1.0 + 0.1 * jax.random.normal(k3, (C,), jnp.float32)
            beta = 0.1 * jax.random.normal(k4, (C,), jnp.float32)
            run_mean = 0.1 * jax.random.normal(k5, (C,), jnp.float32)
            run_var = jnp.abs(jax.random.normal(k6, (C,), jnp.float32)) + 0.5
            scale = gamma / jnp.sqrt(run_var + eps)
            bias = beta + scale * (conv_b - run_mean)
            w_hwio = np.asarray(jnp.transpose(w_pt, (2, 3, 1, 0)))  # (3,3,Ci,Co)
            w_all[b, j] = _banded_conv_weight(w_hwio, width)
            sb_all[b, j, 0] = np.tile(np.asarray(scale), width)
            sb_all[b, j, 1] = np.tile(np.asarray(bias), width)
            blk.append((jnp.asarray(w_hwio), scale, bias))
        raw.append(blk)
    return jnp.asarray(w_all), jnp.asarray(sb_all), raw


def bnet_reference(x_nchw, raw_params, bg_planes):
    """Pure-JAX (XLA conv) reference with the same folded-BN semantics."""
    x = jnp.transpose(x_nchw, (0, 2, 3, 1))
    for blk in raw_params:
        res = x
        h = x
        for j, (w_hwio, scale, bias) in enumerate(blk):
            h = jax.lax.conv_general_dilated(
                h, w_hwio, window_strides=(1, 1), padding="SAME",
                dimension_numbers=("NHWC", "HWIO", "NHWC"))
            h = h * scale + bias
            if j == 0:
                h = jnp.maximum(h, 0.0)
        x = jnp.maximum(h + res, 0.0)
    out = jnp.transpose(x, (0, 3, 1, 2))
    return out[:, :bg_planes], out[:, bg_planes:]


if __name__ == "__main__":
    key = jax.random.PRNGKey(0)
    N, H, W = 2, 16, 16
    bg_planes, feat_planes, num_blocks = 3, 5, 2
    C = bg_planes + feat_planes          # 8 -> W*C = 128 (fully lane-dense)

    key, kx, kp = jax.random.split(key, 3)
    x_nchw = jax.random.normal(kx, (N, C, H, W), jnp.float32)
    w_all, sb_all, raw_params = make_bnet_params(kp, C, num_blocks, W)

    bg, feat = bnet_forward(x_nchw, w_all, sb_all, bg_planes)
    jax.block_until_ready((bg, feat))
    assert bg.shape == (N, bg_planes, H, W)
    assert feat.shape == (N, feat_planes, H, W)

    bg_ref, feat_ref = bnet_reference(x_nchw, raw_params, bg_planes)
    assert np.allclose(np.asarray(bg), np.asarray(bg_ref), atol=2e-3, rtol=2e-3)
    assert np.allclose(np.asarray(feat), np.asarray(feat_ref), atol=2e-3, rtol=2e-3)
    print("KERNEL_OK")
</pallas_src>

<mosaic_0001>
module attributes {stable_mosaic.version = 11 : i64} {
  func.func @_bnet_kernel(%arg0: i32, %arg1: memref<1x16x128xf32, #tpu.memory_space<vmem>>, %arg2: memref<2x2x384x128xf32, #tpu.memory_space<vmem>>, %arg3: memref<2x2x2x128xf32, #tpu.memory_space<vmem>>, %arg4: memref<1x16x128xf32, #tpu.memory_space<vmem>>) attributes {dimension_semantics = [#tpu.dimension_semantics<parallel>], iteration_bounds = array<i64: 2>, scalar_prefetch = 0 : i64, scratch_operands = 0 : i64, tpu.core_type = #tpu.core_type<tc>, window_params = [{transform_indices = @transform_0, window_bounds = array<i64: 1, 16, 128>}, {pipeline_mode = #tpu.pipeline_mode<synchronous>, transform_indices = @transform_1, window_bounds = array<i64: 2, 2, 384, 128>}, {pipeline_mode = #tpu.pipeline_mode<synchronous>, transform_indices = @transform_2, window_bounds = array<i64: 2, 2, 2, 128>}, {transform_indices = @transform_3, window_bounds = array<i64: 1, 16, 128>}]} {
    %cst = arith.constant 0.000000e+00 : f32
    %0 = vector.broadcast %cst : f32 to vector<1x128xf32>
    %c0 = arith.constant 0 : index
    %c0_0 = arith.constant 0 : index
    %c0_1 = arith.constant 0 : index
    %1 = vector.load %arg1[%c0, %c0_0, %c0_1] : memref<1x16x128xf32, #tpu.memory_space<vmem>>, vector<1x16x128xf32>
    %2 = vector.shape_cast %1 : vector<1x16x128xf32> to vector<16x128xf32>
    %3 = vector.extract_strided_slice %2 {offsets = [0, 0], sizes = [15, 128], strides = [1, 1]} : vector<16x128xf32> to vector<15x128xf32>
    %4 = tpu.concatenate %0, %3 in 0 : vector<1x128xf32>, vector<15x128xf32> -> vector<16x128xf32>
    %5 = vector.extract_strided_slice %2 {offsets = [1, 0], sizes = [15, 128], strides = [1, 1]} : vector<16x128xf32> to vector<15x128xf32>
    %6 = tpu.concatenate %5, %0 in 0 : vector<15x128xf32>, vector<1x128xf32> -> vector<16x128xf32>
    %7 = tpu.concatenate %4, %2, %6 in 1 : vector<16x128xf32>, vector<16x128xf32>, vector<16x128xf32> -> vector<16x384xf32>
    %c0_2 = arith.constant 0 : index
    %c0_3 = arith.constant 0 : index
    %c0_4 = arith.constant 0 : index
    %c0_5 = arith.constant 0 : index
    %8 = vector.load %arg2[%c0_2, %c0_3, %c0_4, %c0_5] : memref<2x2x384x128xf32, #tpu.memory_space<vmem>>, vector<1x1x384x128xf32>
    %9 = vector.shape_cast %8 : vector<1x1x384x128xf32> to vector<384x128xf32>
    %cst_6 = arith.constant dense<0.000000e+00> : vector<16x128xf32>
    %10 = tpu.matmul %7, %9, %cst_6 {dimension_numbers = #tpu.dot_dimension_numbers<[1], [0], [0], [1], [0, 0, 1, 1], [], []>} : vector<16x384xf32>, vector<384x128xf32>, vector<16x128xf32> -> vector<16x128xf32>
    %c0_7 = arith.constant 0 : index
    %c0_8 = arith.constant 0 : index
    %c0_9 = arith.constant 0 : index
    %c0_10 = arith.constant 0 : index
    %11 = vector.load %arg3[%c0_7, %c0_8, %c0_9, %c0_10] : memref<2x2x2x128xf32, #tpu.memory_space<vmem>>, vector<1x1x2x128xf32>
    %12 = vector.shape_cast %11 : vector<1x1x2x128xf32> to vector<2x128xf32>
    %13 = vector.extract_strided_slice %12 {offsets = [0, 0], sizes = [1, 128], strides = [1, 1]} : vector<2x128xf32> to vector<1x128xf32>
    %14 = vector.broadcast %13 : vector<1x128xf32> to vector<16x128xf32>
    %15 = arith.mulf %10, %14 : vector<16x128xf32>
    %16 = vector.extract_strided_slice %12 {offsets = [1, 0], sizes = [1, 128], strides = [1, 1]} : vector<2x128xf32> to vector<1x128xf32>
    %17 = vector.broadcast %16 : vector<1x128xf32> to vector<16x128xf32>
    %18 = arith.addf %15, %17 : vector<16x128xf32>
    %cst_11 = arith.constant 0.000000e+00 : f32
    %19 = vector.broadcast %cst_11 : f32 to vector<16x128xf32>
    %20 = arith.maximumf %18, %19 : vector<16x128xf32>
    %21 = vector.extract_strided_slice %20 {offsets = [0, 0], sizes = [15, 128], strides = [1, 1]} : vector<16x128xf32> to vector<15x128xf32>
    %22 = tpu.concatenate %0, %21 in 0 : vector<1x128xf32>, vector<15x128xf32> -> vector<16x128xf32>
    %23 = vector.extract_strided_slice %20 {offsets = [1, 0], sizes = [15, 128], strides = [1, 1]} : vector<16x128xf32> to vector<15x128xf32>
    %24 = tpu.concatenate %23, %0 in 0 : vector<15x128xf32>, vector<1x128xf32> -> vector<16x128xf32>
    %25 = tpu.concatenate %22, %20, %24 in 1 : vector<16x128xf32>, vector<16x128xf32>, vector<16x128xf32> -> vector<16x384xf32>
    %c0_12 = arith.constant 0 : index
    %c1 = arith.constant 1 : index
    %c0_13 = arith.constant 0 : index
    %c0_14 = arith.constant 0 : index
    %26 = vector.load %arg2[%c0_12, %c1, %c0_13, %c0_14] : memref<2x2x384x128xf32, #tpu.memory_space<vmem>>, vector<1x1x384x128xf32>
    %27 = vector.shape_cast %26 : vector<1x1x384x128xf32> to vector<384x128xf32>
    %cst_15 = arith.constant dense<0.000000e+00> : vector<16x128xf32>
    %28 = tpu.matmul %25, %27, %cst_15 {dimension_numbers = #tpu.dot_dimension_numbers<[1], [0], [0], [1], [0, 0, 1, 1], [], []>} : vector<16x384xf32>, vector<384x128xf32>, vector<16x128xf32> -> vector<16x128xf32>
    %c0_16 = arith.constant 0 : index
    %c1_17 = arith.constant 1 : index
    %c0_18 = arith.constant 0 : index
    %c0_19 = arith.constant 0 : index
    %29 = vector.load %arg3[%c0_16, %c1_17, %c0_18, %c0_19] : memref<2x2x2x128xf32, #tpu.memory_space<vmem>>, vector<1x1x2x128xf32>
    %30 = vector.shape_cast %29 : vector<1x1x2x128xf32> to vector<2x128xf32>
    %31 = vector.extract_strided_slice %30 {offsets = [0, 0], sizes = [1, 128], strides = [1, 1]} : vector<2x128xf32> to vector<1x128xf32>
    %32 = vector.broadcast %31 : vector<1x128xf32> to vector<16x128xf32>
    %33 = arith.mulf %28, %32 : vector<16x128xf32>
    %34 = vector.extract_strided_slice %30 {offsets = [1, 0], sizes = [1, 128], strides = [1, 1]} : vector<2x128xf32> to vector<1x128xf32>
    %35 = vector.broadcast %34 : vector<1x128xf32> to vector<16x128xf32>
    %36 = arith.addf %33, %35 : vector<16x128xf32>
    %37 = arith.addf %36, %2 : vector<16x128xf32>
    %cst_20 = arith.constant 0.000000e+00 : f32
    %38 = vector.broadcast %cst_20 : f32 to vector<16x128xf32>
    %39 = arith.maximumf %37, %38 : vector<16x128xf32>
    %40 = vector.extract_strided_slice %39 {offsets = [0, 0], sizes = [15, 128], strides = [1, 1]} : vector<16x128xf32> to vector<15x128xf32>
    %41 = tpu.concatenate %0, %40 in 0 : vector<1x128xf32>, vector<15x128xf32> -> vector<16x128xf32>
    %42 = vector.extract_strided_slice %39 {offsets = [1, 0], sizes = [15, 128], strides = [1, 1]} : vector<16x128xf32> to vector<15x128xf32>
    %43 = tpu.concatenate %42, %0 in 0 : vector<15x128xf32>, vector<1x128xf32> -> vector<16x128xf32>
    %44 = tpu.concatenate %41, %39, %43 in 1 : vector<16x128xf32>, vector<16x128xf32>, vector<16x128xf32> -> vector<16x384xf32>
    %c1_21 = arith.constant 1 : index
    %c0_22 = arith.constant 0 : index
    %c0_23 = arith.constant 0 : index
    %c0_24 = arith.constant 0 : index
    %45 = vector.load %arg2[%c1_21, %c0_22, %c0_23, %c0_24] : memref<2x2x384x128xf32, #tpu.memory_space<vmem>>, vector<1x1x384x128xf32>
    %46 = vector.shape_cast %45 : vector<1x1x384x128xf32> to vector<384x128xf32>
    %cst_25 = arith.constant dense<0.000000e+00> : vector<16x128xf32>
    %47 = tpu.matmul %44, %46, %cst_25 {dimension_numbers = #tpu.dot_dimension_numbers<[1], [0], [0], [1], [0, 0, 1, 1], [], []>} : vector<16x384xf32>, vector<384x128xf32>, vector<16x128xf32> -> vector<16x128xf32>
    %c1_26 = arith.constant 1 : index
    %c0_27 = arith.constant 0 : index
    %c0_28 = arith.constant 0 : index
    %c0_29 = arith.constant 0 : index
    %48 = vector.load %arg3[%c1_26, %c0_27, %c0_28, %c0_29] : memref<2x2x2x128xf32, #tpu.memory_space<vmem>>, vector<1x1x2x128xf32>
    %49 = vector.shape_cast %48 : vector<1x1x2x128xf32> to vector<2x128xf32>
    %50 = vector.extract_strided_slice %49 {offsets = [0, 0], sizes = [1, 128], strides = [1, 1]} : vector<2x128xf32> to vector<1x128xf32>
    %51 = vector.broadcast %50 : vector<1x128xf32> to vector<16x128xf32>
    %52 = arith.mulf %47, %51 : vector<16x128xf32>
    %53 = vector.extract_strided_slice %49 {offsets = [1, 0], sizes = [1, 128], strides = [1, 1]} : vector<2x128xf32> to vector<1x128xf32>
    %54 = vector.broadcast %53 : vector<1x128xf32> to vector<16x128xf32>
    %55 = arith.addf %52, %54 : vector<16x128xf32>
    %cst_30 = arith.constant 0.000000e+00 : f32
    %56 = vector.broadcast %cst_30 : f32 to vector<16x128xf32>
    %57 = arith.maximumf %55, %56 : vector<16x128xf32>
    %58 = vector.extract_strided_slice %57 {offsets = [0, 0], sizes = [15, 128], strides = [1, 1]} : vector<16x128xf32> to vector<15x128xf32>
    %59 = tpu.concatenate %0, %58 in 0 : vector<1x128xf32>, vector<15x128xf32> -> vector<16x128xf32>
    %60 = vector.extract_strided_slice %57 {offsets = [1, 0], sizes = [15, 128], strides = [1, 1]} : vector<16x128xf32> to vector<15x128xf32>
    %61 = tpu.concatenate %60, %0 in 0 : vector<15x128xf32>, vector<1x128xf32> -> vector<16x128xf32>
    %62 = tpu.concatenate %59, %57, %61 in 1 : vector<16x128xf32>, vector<16x128xf32>, vector<16x128xf32> -> vector<16x384xf32>
    %c1_31 = arith.constant 1 : index
    %c1_32 = arith.constant 1 : index
    %c0_33 = arith.constant 0 : index
    %c0_34 = arith.constant 0 : index
    %63 = vector.load %arg2[%c1_31, %c1_32, %c0_33, %c0_34] : memref<2x2x384x128xf32, #tpu.memory_space<vmem>>, vector<1x1x384x128xf32>
    %64 = vector.shape_cast %63 : vector<1x1x384x128xf32> to vector<384x128xf32>
    %cst_35 = arith.constant dense<0.000000e+00> : vector<16x128xf32>
    %65 = tpu.matmul %62, %64, %cst_35 {dimension_numbers = #tpu.dot_dimension_numbers<[1], [0], [0], [1], [0, 0, 1, 1], [], []>} : vector<16x384xf32>, vector<384x128xf32>, vector<16x128xf32> -> vector<16x128xf32>
    %c1_36 = arith.constant 1 : index
    %c1_37 = arith.constant 1 : index
    %c0_38 = arith.constant 0 : index
    %c0_39 = arith.constant 0 : index
    %66 = vector.load %arg3[%c1_36, %c1_37, %c0_38, %c0_39] : memref<2x2x2x128xf32, #tpu.memory_space<vmem>>, vector<1x1x2x128xf32>
    %67 = vector.shape_cast %66 : vector<1x1x2x128xf32> to vector<2x128xf32>
    %68 = vector.extract_strided_slice %67 {offsets = [0, 0], sizes = [1, 128], strides = [1, 1]} : vector<2x128xf32> to vector<1x128xf32>
    %69 = vector.broadcast %68 : vector<1x128xf32> to vector<16x128xf32>
    %70 = arith.mulf %65, %69 : vector<16x128xf32>
    %71 = vector.extract_strided_slice %67 {offsets = [1, 0], sizes = [1, 128], strides = [1, 1]} : vector<2x128xf32> to vector<1x128xf32>
    %72 = vector.broadcast %71 : vector<1x128xf32> to vector<16x128xf32>
    %73 = arith.addf %70, %72 : vector<16x128xf32>
    %74 = arith.addf %73, %39 : vector<16x128xf32>
    %cst_40 = arith.constant 0.000000e+00 : f32
    %75 = vector.broadcast %cst_40 : f32 to vector<16x128xf32>
    %76 = arith.maximumf %74, %75 : vector<16x128xf32>
    %c0_41 = arith.constant 0 : index
    %c0_42 = arith.constant 0 : index
    %c0_43 = arith.constant 0 : index
    %77 = vector.load %arg4[%c0_41, %c0_42, %c0_43] : memref<1x16x128xf32, #tpu.memory_space<vmem>>, vector<1x16x128xf32>
    %78 = vector.shape_cast %77 : vector<1x16x128xf32> to vector<16x128xf32>
    %79 = vector.shape_cast %76 : vector<16x128xf32> to vector<1x16x128xf32>
    tpu.vector_store %arg4[%c0_41, %c0_42, %c0_43], %79 {strides = array<i32>} : memref<1x16x128xf32, #tpu.memory_space<vmem>>, vector<1x16x128xf32>,
    return
  }
  func.func @transform_0(%arg0: i32) -> (i32, i32, i32) {
    %c0_i32 = arith.constant 0 : i32
    %c0_i32_0 = arith.constant 0 : i32
    %c0_i32_1 = arith.constant 0 : i32
    return %arg0, %c0_i32, %c0_i32_0 : i32, i32, i32
  }
  func.func @transform_1(%arg0: i32) -> (i32, i32, i32, i32) {
    %c0_i32 = arith.constant 0 : i32
    %c0_i32_0 = arith.constant 0 : i32
    %c0_i32_1 = arith.constant 0 : i32
    %c0_i32_2 = arith.constant 0 : i32
    %c0_i32_3 = arith.constant 0 : i32
    return %c0_i32, %c0_i32_0, %c0_i32_1, %c0_i32_2 : i32, i32, i32, i32
  }
  func.func @transform_2(%arg0: i32) -> (i32, i32, i32, i32) {
    %c0_i32 = arith.constant 0 : i32
    %c0_i32_0 = arith.constant 0 : i32
    %c0_i32_1 = arith.constant 0 : i32
    %c0_i32_2 = arith.constant 0 : i32
    %c0_i32_3 = arith.constant 0 : i32
    return %c0_i32, %c0_i32_0, %c0_i32_1, %c0_i32_2 : i32, i32, i32, i32
  }
  func.func @transform_3(%arg0: i32) -> (i32, i32, i32) {
    %c0_i32 = arith.constant 0 : i32
    %c0_i32_0 = arith.constant 0 : i32
    %c0_i32_1 = arith.constant 0 : i32
    return %arg0, %c0_i32, %c0_i32_0 : i32, i32, i32
  }
}

</mosaic_0001>

<llo_original>
// kernel: tpu_custom_call.1
$region0: #{tpu_custom_call.1}
  #allocation0 [shape = 'u32[]', space=smem, size = 0x4, offset = 0x4, fixed_abs, tag = 'smem constant byte address 0x4 - core index']
  #allocation1 [shape = 'u32[144,128]{1,0:T(1,128)}', space=vmem, size = 0x12000, scoped, tag = 'internal scratch']
  %s0 = inlined_call_operand.hbm [shape: f32[2,16,128], index: 0, kind: input, shape index: {}]
  %s1 = inlined_call_operand.hbm [shape: f32[2,2,384,128], index: 1, kind: input, shape index: {}]
  %s2 = inlined_call_operand.hbm [shape: f32[2,2,2,128], index: 2, kind: input, shape index: {}]
  %s3 = inlined_call_operand.hbm [shape: f32[2,16,128], index: 3, kind: output, shape index: {}]
  %s4 = sld [smem:[#allocation0]]
  $region57: #{tpu_custom_call.1} parent=0
    _
  %s6 = ssub.s32 1, %s4
  %s7 = scalar_select 0, %s6, %s4
  $region1: #{tpu_custom_call.1} parent=0
    #allocation2 [shape = 'u8[16384]{0}', space=vmem, size = 0x4000, scoped, tag = 'input window, operand 0']
    #allocation3 [shape = 's32[2]{0}', space=sflag, size = 0x8, scoped, tag = 'scoped memory for tpu_custom_call.1']
    #allocation4 [shape = 's32[2]{0}', space=sflag, size = 0x8, scoped, tag = 'scoped memory for tpu_custom_call.1']
    #allocation5 [shape = 'u8[786432]{0}', space=vmem, size = 0xc0000, scoped, tag = 'input window, operand 1, single buffered']
    #allocation6 [shape = 's32[1]{0}', space=sflag, size = 0x4, scoped, tag = 'scoped memory for tpu_custom_call.1']
    #allocation7 [shape = 'u8[4096]{0}', space=vmem, size = 0x1000, scoped, tag = 'input window, operand 2, single buffered']
    #allocation8 [shape = 'u8[16384]{0}', space=vmem, size = 0x4000, scoped, tag = 'output window, operand 0']
    %8 = vsyncpa [#allocation3], 0
    %s9 = scalar_lea.sflag [#allocation3], 1
    %10 = vsyncpa %s9, 0
    %11 = vsyncpa [#allocation6], 0
    %12 = vsyncpa [#allocation4], 0
    %s13 = scalar_lea.sflag [#allocation4], 1
    %14 = vsyncpa %s13, 0
    loop: start=0, step=1, limit=4
    $region2: #{tpu_custom_call.1} parent=1 // loop_pre_header
      _
    $region3: #{tpu_custom_call.1} parent=1 // loop_header
      %s16 = sphi 0, %s20
      %p17 = scmp.ge.s32.totalorder %s16, 4
      %s26 = sphi 0, %s28
      %s29 = sphi 0, %s26
      %s30 = sphi 0, %s29
      %s46 = sphi 0, %s30
      %s50 = sphi 0, %s50
      %s52 = sphi 0, %s50
      %s53 = sphi 0, %s52
      %s67 = sphi 0, %s53
      %s71 = sphi 0, %s71
      %s73 = sphi 0, %s71
      %s74 = sphi 0, %s73
      %s88 = sphi 0, %s74
      %s94 = sphi 0, %s96
      %s97 = sphi 0, %s94
      %s98 = sphi 0, %s97
      %s114 = sphi 0, %s98
    $region4: #{tpu_custom_call.1} parent=1 // loop_header_branch
      %19 = sbr.rel (%p17) target = $region8
    $region5: #{tpu_custom_call.1} parent=1 // loop_body
      %s21 = ssub.s32 %s16, 1
      %s22 = ssub.s32 %s16, 2
      %s23 = sadd.s32 %s16, 1
      %s24 = ssub.s32 %s16, %s23
      %p25 = scmp.eq.s32.totalorder %s24, 0
      %s27 = sadd.s32 %s26, 1
      %s28 = scalar_select %p25, %s26, %s27
      %p31 = pneg %p25
      %p32 = scmp.eq.s32.totalorder %s16, 1
      %p33 = por %p31, %p32
      %p34 = scmp.ne.s32.totalorder %s26, %s29
      %p35 = scmp.eq.s32.totalorder %s16, 0
      %p36 = por %p34, %p35
      %p37 = scmp.ne.s32.totalorder %s26, %s29
      %p38 = scmp.eq.s32.totalorder %s21, 1
      %p39 = por %p37, %p38
      %p40 = scmp.ne.s32.totalorder %s29, %s30
      %p41 = scmp.eq.s32.totalorder %s21, 0
      %p42 = por %p40, %p41
      %p43 = scmp.ne.s32.totalorder %s29, %s30
      %p44 = scmp.eq.s32.totalorder %s22, 1
      %p45 = por %p43, %p44
      %p47 = scmp.ne.s32.totalorder %s30, %s46
      %p48 = scmp.eq.s32.totalorder %s22, 0
      %p49 = por %p47, %p48
      %s51 = sadd.s32 %s50, 1
      %p54 = scmp.eq.s32.totalorder %s16, 1
      %p55 = scmp.ne.s32.totalorder %s50, %s52
      %p56 = scmp.eq.s32.totalorder %s16, 0
      %p57 = por %p55, %p56
      %p58 = scmp.ne.s32.totalorder %s50, %s52
      %p59 = scmp.eq.s32.totalorder %s21, 1
      %p60 = por %p58, %p59
      %p61 = scmp.ne.s32.totalorder %s52, %s53
      %p62 = scmp.eq.s32.totalorder %s21, 0
      %p63 = por %p61, %p62
      %p64 = scmp.ne.s32.totalorder %s52, %s53
      %p65 = scmp.eq.s32.totalorder %s22, 1
      %p66 = por %p64, %p65
      %p68 = scmp.ne.s32.totalorder %s53, %s67
      %p69 = scmp.eq.s32.totalorder %s22, 0
      %p70 = por %p68, %p69
      %s72 = sadd.s32 %s71, 1
      %p75 = scmp.eq.s32.totalorder %s16, 1
      %p76 = scmp.ne.s32.totalorder %s71, %s73
      %p77 = scmp.eq.s32.totalorder %s16, 0
      %p78 = por %p76, %p77
      %p79 = scmp.ne.s32.totalorder %s71, %s73
      %p80 = scmp.eq.s32.totalorder %s21, 1
      %p81 = por %p79, %p80
      %p82 = scmp.ne.s32.totalorder %s73, %s74
      %p83 = scmp.eq.s32.totalorder %s21, 0
      %p84 = por %p82, %p83
      %p85 = scmp.ne.s32.totalorder %s73, %s74
      %p86 = scmp.eq.s32.totalorder %s22, 1
      %p87 = por %p85, %p86
      %p89 = scmp.ne.s32.totalorder %s74, %s88
      %p90 = scmp.eq.s32.totalorder %s22, 0
      %p91 = por %p89, %p90
      %s92 = ssub.s32 %s16, %s23
      %p93 = scmp.eq.s32.totalorder %s92, 0
      %s95 = sadd.s32 %s94, 1
      %s96 = scalar_select %p93, %s94, %s95
      %p99 = pneg %p93
      %p100 = scmp.eq.s32.totalorder %s16, 1
      %p101 = por %p99, %p100
      %p102 = scmp.ne.s32.totalorder %s94, %s97
      %p103 = scmp.eq.s32.totalorder %s16, 0
      %p104 = por %p102, %p103
      %p105 = scmp.ne.s32.totalorder %s94, %s97
      %p106 = scmp.eq.s32.totalorder %s21, 1
      %p107 = por %p105, %p106
      %p108 = scmp.ne.s32.totalorder %s97, %s98
      %p109 = scmp.eq.s32.totalorder %s21, 0
      %p110 = por %p108, %p109
      %p111 = scmp.ne.s32.totalorder %s97, %s98
      %p112 = scmp.eq.s32.totalorder %s22, 1
      %p113 = por %p111, %p112
      %p115 = scmp.ne.s32.totalorder %s98, %s114
      %p116 = scmp.eq.s32.totalorder %s22, 0
      %p117 = por %p115, %p116
      %p118 = scmp.le.s32.totalorder 1, %s16
      %p119 = scmp.lt.s32.totalorder %s16, 3
      %p120 = pnand %p118, %p119
      %p121 = pneg %p120
      // Predicated region
      $region9: #{tpu_custom_call.1} parent=5 // pred_check
        _
      $region10: #{tpu_custom_call.1} parent=5 // pred_check_branch
        %123 = sbr.rel (%p120) target = $region12
      $region11: #{tpu_custom_call.1} parent=5 // pred_region
        %s124 = ssub.s32 %s16, 1
        // Predicated region
        $region13: #{tpu_custom_call.1} parent=11 // pred_check
          %p125 = pneg %p63
        $region14: #{tpu_custom_call.1} parent=11 // pred_check_branch
          %127 = sbr.rel (%p125) target = $region16
        $region15: #{tpu_custom_call.1} parent=11 // pred_region
          %s129 = ssub.s32 24576, 24576
          %130 = vsyncadd [#allocation6], %s129
          %s131 = sshll.u32 [#allocation5], 4
          %s132 = int_to_ptr.vmem [resolvable:$true] %s131
          %137 = dma.hbm_to_vmem [thread:$0]  %s1, 24576, %s132, [#allocation6], 128, 128, 8
        $region16: #{tpu_custom_call.1} parent=11 // pred_fallthru
          _
        // Predicated region
        $region17: #{tpu_custom_call.1} parent=11 // pred_check
          %p138 = pneg %p84
        $region18: #{tpu_custom_call.1} parent=11 // pred_check_branch
          %140 = sbr.rel (%p138) target = $region20
        $region19: #{tpu_custom_call.1} parent=11 // pred_region
          %s142 = ssub.s32 128, 128
          %143 = vsyncadd [#allocation6], %s142
          %s144 = sshll.u32 [#allocation7], 4
          %s145 = int_to_ptr.vmem [resolvable:$true] %s144
          %150 = dma.hbm_to_vmem [thread:$0]  %s2, 128, %s145, [#allocation6], 32, 32, 2
        $region20: #{tpu_custom_call.1} parent=11 // pred_fallthru
          _
      $region12: #{tpu_custom_call.1} parent=5 // pred_fallthru
        _
      %p151 = scmp.lt.s32.totalorder %s16, 2
      // Predicated region
      $region21: #{tpu_custom_call.1} parent=5 // pred_check
        %p152 = pneg %p151
      $region22: #{tpu_custom_call.1} parent=5 // pred_check_branch
        %154 = sbr.rel (%p152) target = $region24
      $region23: #{tpu_custom_call.1} parent=5 // pred_region
        // Predicated region
        $region25: #{tpu_custom_call.1} parent=23 // pred_check
          %p155 = pneg %p36
        $region26: #{tpu_custom_call.1} parent=23 // pred_check_branch
          %157 = sbr.rel (%p155) target = $region28
        $region27: #{tpu_custom_call.1} parent=23 // pred_region
          %s158 = sand.u32 %s26, 1
          %s159 = scalar_lea.sflag [#allocation3], %s158
          %s160 = sand.u32 %s26, 1
          %s161 = smul.addr %s160, 16
          %s162 = scalar_lea.vmem [#allocation2], %s161
          %s164 = ssub.s32 256, 256
          %165 = vsyncadd %s159, %s164
          %s166 = smul.addr %s16, 2
          %s167 = smul.addr %s166, 128
          %s168 = scalar_lea.hbm %s0, %s167
          %s169 = sshll.u32 %s162, 4
          %s170 = int_to_ptr.vmem [resolvable:$true] %s169
          %175 = dma.hbm_to_vmem [thread:$0]  %s168, 256, %s170, %s159, 128, 128, 8
        $region28: #{tpu_custom_call.1} parent=23 // pred_fallthru
          _
      $region24: #{tpu_custom_call.1} parent=5 // pred_fallthru
        _
      %p176 = scmp.le.s32.totalorder 1, %s16
      %p177 = scmp.lt.s32.totalorder %s16, 3
      %p178 = pnand %p176, %p177
      %p179 = pneg %p178
      // Predicated region
      $region29: #{tpu_custom_call.1} parent=5 // pred_check
        _
      $region30: #{tpu_custom_call.1} parent=5 // pred_check_branch
        %181 = sbr.rel (%p178) target = $region32
      $region31: #{tpu_custom_call.1} parent=5 // pred_region
        %s182 = ssub.s32 %s16, 1
        %s183 = sand.u32 %s29, 1
        %s184 = scalar_lea.sflag [#allocation3], %s183
        %s185 = sand.u32 %s29, 1
        %s186 = smul.addr %s185, 16
        %s187 = scalar_lea.vmem [#allocation2], %s186
        // Predicated region
        $region33: #{tpu_custom_call.1} parent=31 // pred_check
          %p188 = pneg %p42
        $region34: #{tpu_custom_call.1} parent=31 // pred_check_branch
          %190 = sbr.rel (%p188) target = $region36
        $region35: #{tpu_custom_call.1} parent=31 // pred_region
          %191 = dma.done %s184, 256
        $region36: #{tpu_custom_call.1} parent=31 // pred_fallthru
          _
        // Predicated region
        $region37: #{tpu_custom_call.1} parent=31 // pred_check
          %p192 = pneg %p63
        $region38: #{tpu_custom_call.1} parent=31 // pred_check_branch
          %194 = sbr.rel (%p192) target = $region40
        $region39: #{tpu_custom_call.1} parent=31 // pred_region
          %195 = dma.done [#allocation6], 24576
        $region40: #{tpu_custom_call.1} parent=31 // pred_fallthru
          _
        // Predicated region
        $region41: #{tpu_custom_call.1} parent=31 // pred_check
          %p196 = pneg %p84
        $region42: #{tpu_custom_call.1} parent=31 // pred_check_branch
          %198 = sbr.rel (%p196) target = $region44
        $region43: #{tpu_custom_call.1} parent=31 // pred_region
          %199 = dma.done [#allocation6], 128
        $region44: #{tpu_custom_call.1} parent=31 // pred_fallthru
          _
        %s200 = sand.u32 %s29, 1
        %s201 = scalar_lea.sflag [#allocation3], %s200
        %s202 = sand.u32 %s29, 1
        %s203 = smul.addr %s202, 16
        %s204 = scalar_lea.vmem [#allocation2], %s203
        %p205 = pneg %p42
        %p206 = pneg %p39
        %p207 = pneg %p63
        %p208 = pneg %p60
        %p209 = pneg %p84
        %p210 = pneg %p81
        %p211 = pneg %p110
        %p212 = pneg %p107
        %s213 = sand.u32 %s97, 1
        %s214 = scalar_lea.sflag [#allocation4], %s213
        %s215 = sand.u32 %s97, 1
        %s216 = smul.addr %s215, 16
        %s217 = scalar_lea.vmem [#allocation8], %s216
        %v218 = vld [vmem:[%s187] sm:$0xff]
        %v219 = vld [vmem:[%s187 + $0x8] sm:$0xff]
        %vm222 = vcmask 1040384
        %v223 = vrot.slane %v218, 7
        %v224 = vrot.slane %v219, 7
        %v225 = vsel %vm222, %v223, %v224
        %v228 = vsel %vm222, 0.0, %v223
        %vm229 = vcmask 1046528
        %v230 = vrot.slane %v218, 1
        %v231 = vrot.slane %v219, 1
        %v232 = vsel %vm229, %v230, %v231
        %v235 = vsel %vm229, %v231, 0.0
        %v236 = vld [vmem:[#allocation5] sm:$0xff]
        %v237 = vld [vmem:[#allocation5 + $0x8] sm:$0xff]
        %v238 = vld [vmem:[#allocation5 + $0x10] sm:$0xff]
        %v239 = vld [vmem:[#allocation5 + $0x18] sm:$0xff]
        %v240 = vld [vmem:[#allocation5 + $0x20] sm:$0xff]
        %v241 = vld [vmem:[#allocation5 + $0x28] sm:$0xff]
        %v242 = vld [vmem:[#allocation5 + $0x30] sm:$0xff]
        %v243 = vld [vmem:[#allocation5 + $0x38] sm:$0xff]
        %v244 = vld [vmem:[#allocation5 + $0x40] sm:$0xff]
        %v245 = vld [vmem:[#allocation5 + $0x48] sm:$0xff]
        %v246 = vld [vmem:[#allocation5 + $0x50] sm:$0xff]
        %v247 = vld [vmem:[#allocation5 + $0x58] sm:$0xff]
        %v248 = vld [vmem:[#allocation5 + $0x60] sm:$0xff]
        %v249 = vld [vmem:[#allocation5 + $0x68] sm:$0xff]
        %v250 = vld [vmem:[#allocation5 + $0x70] sm:$0xff]
        %v251 = vld [vmem:[#allocation5 + $0x78] sm:$0xff]
        %v252 = vld [vmem:[#allocation5 + $0x80] sm:$0xff]
        %v253 = vld [vmem:[#allocation5 + $0x88] sm:$0xff]
        %v254 = vld [vmem:[#allocation5 + $0x90] sm:$0xff]
        %v255 = vld [vmem:[#allocation5 + $0x98] sm:$0xff]
        %v256 = vld [vmem:[#allocation5 + $0xa0] sm:$0xff]
        %v257 = vld [vmem:[#allocation5 + $0xa8] sm:$0xff]
        %v258 = vld [vmem:[#allocation5 + $0xb0] sm:$0xff]
        %v259 = vld [vmem:[#allocation5 + $0xb8] sm:$0xff]
        %v260 = vld [vmem:[#allocation5 + $0xc0] sm:$0xff]
        %v261 = vld [vmem:[#allocation5 + $0xc8] sm:$0xff]
        %v262 = vld [vmem:[#allocation5 + $0xd0] sm:$0xff]
        %v263 = vld [vmem:[#allocation5 + $0xd8] sm:$0xff]
        %v264 = vld [vmem:[#allocation5 + $0xe0] sm:$0xff]
        %v265 = vld [vmem:[#allocation5 + $0xe8] sm:$0xff]
        %v266 = vld [vmem:[#allocation5 + $0xf0] sm:$0xff]
        %v267 = vld [vmem:[#allocation5 + $0xf8] sm:$0xff]
        %v268 = vld [vmem:[#allocation5 + $0x100] sm:$0xff]
        %v269 = vld [vmem:[#allocation5 + $0x108] sm:$0xff]
        %v270 = vld [vmem:[#allocation5 + $0x110] sm:$0xff]
        %v271 = vld [vmem:[#allocation5 + $0x118] sm:$0xff]
        %v272 = vld [vmem:[#allocation5 + $0x120] sm:$0xff]
        %v273 = vld [vmem:[#allocation5 + $0x128] sm:$0xff]
        %v274 = vld [vmem:[#allocation5 + $0x130] sm:$0xff]
        %v275 = vld [vmem:[#allocation5 + $0x138] sm:$0xff]
        %v276 = vld [vmem:[#allocation5 + $0x140] sm:$0xff]
        %v277 = vld [vmem:[#allocation5 + $0x148] sm:$0xff]
        %v278 = vld [vmem:[#allocation5 + $0x150] sm:$0xff]
        %v279 = vld [vmem:[#allocation5 + $0x158] sm:$0xff]
        %v280 = vld [vmem:[#allocation5 + $0x160] sm:$0xff]
        %v281 = vld [vmem:[#allocation5 + $0x168] sm:$0xff]
        %v282 = vld [vmem:[#allocation5 + $0x170] sm:$0xff]
        %v283 = vld [vmem:[#allocation5 + $0x178] sm:$0xff]
        %284 = vmatprep.subr.mxu0 0.0
        %285 = vmatpush1.msra.mxu0 %v251
        %286 = vmatprep.subr.mxu0 0.0
        %287 = vmatpush1.msra.mxu0 %v250
        %288 = vmatprep.subr.mxu0 0.0
        %289 = vmatpush1.msra.mxu0 %v249
        %290 = vmatprep.subr.mxu0 0.0
        %291 = vmatpush1.msra.mxu0 %v248
        %292 = vmatprep.subr.mxu0 0.0
        %293 = vmatpush1.msra.mxu0 %v247
        %294 = vmatprep.subr.mxu0 0.0
        %295 = vmatpush1.msra.mxu0 %v246
        %296 = vmatprep.subr.mxu0 0.0
        %297 = vmatpush1.msra.mxu0 %v245
        %298 = vmatprep.subr.mxu0 0.0
        %299 = vmatpush1.msra.mxu0 %v244
        %300 = vmatprep.subr.mxu0 0.0
        %301 = vmatpush1.msra.mxu0 %v243
        %302 = vmatprep.subr.mxu0 0.0
        %303 = vmatpush1.msra.mxu0 %v242
        %304 = vmatprep.subr.mxu0 0.0
        %305 = vmatpush1.msra.mxu0 %v241
        %306 = vmatprep.subr.mxu0 0.0
        %307 = vmatpush1.msra.mxu0 %v240
        %308 = vmatprep.subr.mxu0 0.0
        %309 = vmatpush1.msra.mxu0 %v239
        %310 = vmatprep.subr.mxu0 0.0
        %311 = vmatpush1.msra.mxu0 %v238
        %312 = vmatprep.subr.mxu0 0.0
        %313 = vmatpush1.msra.mxu0 %v237
        %314 = vmatprep.subr.mxu0 0.0
        %315 = vmatpush1.msra.mxu0 %v236
        %316 = vmatprep.subr.mxu0 0.0
        %317 = vmatpush2.msra.mxu0 %v267
        %318 = vmatprep.subr.mxu0 0.0
        %319 = vmatpush2.msra.mxu0 %v266
        %320 = vmatprep.subr.mxu0 0.0
        %321 = vmatpush2.msra.mxu0 %v265
        %322 = vmatprep.subr.mxu0 0.0
        %323 = vmatpush2.msra.mxu0 %v264
        %324 = vmatprep.subr.mxu0 0.0
        %325 = vmatpush2.msra.mxu0 %v263
        %326 = vmatprep.subr.mxu0 0.0
        %327 = vmatpush2.msra.mxu0 %v262
        %328 = vmatprep.subr.mxu0 0.0
        %329 = vmatpush2.msra.mxu0 %v261
        %330 = vmatprep.subr.mxu0 0.0
        %331 = vmatpush2.msra.mxu0 %v260
        %332 = vmatprep.subr.mxu0 0.0
        %333 = vmatpush2.msra.mxu0 %v259
        %334 = vmatprep.subr.mxu0 0.0
        %335 = vmatpush2.msra.mxu0 %v258
        %336 = vmatprep.subr.mxu0 0.0
        %337 = vmatpush2.msra.mxu0 %v257
        %338 = vmatprep.subr.mxu0 0.0
        %339 = vmatpush2.msra.mxu0 %v256
        %340 = vmatprep.subr.mxu0 0.0
        %341 = vmatpush2.msra.mxu0 %v255
        %342 = vmatprep.subr.mxu0 0.0
        %343 = vmatpush2.msra.mxu0 %v254
        %344 = vmatprep.subr.mxu0 0.0
        %345 = vmatpush2.msra.mxu0 %v253
        %346 = vmatprep.subr.mxu0 0.0
        %347 = vmatpush2.msra.mxu0 %v252
        %348 = vmatprep.mubr.f32.mxu0 %v218
        %349 = vmatmul.mubr.f32.gmra.mxu0 %v228
        %v350 = vpop.f32.mrf.mxu0
        %v351 = vadd.f32 0.0, %v350
        %v352 = vpop.f32.mrf.mxu0
        %353 = vmatprep.mubr.f32.mxu0 %v219
        %354 = vmatmul.mubr.f32.gmra.mxu0 %v225
        %v355 = vpop.f32.mrf.mxu0
        %v356 = vadd.f32 0.0, %v355
        %v357 = vpop.f32.mrf.mxu0
        %358 = vdwg.mxu0
        %359 = vmatprep.subr.mxu0 0.0
        %360 = vmatpush1.msra.mxu0 %v283
        %361 = vmatprep.subr.mxu0 0.0
        %362 = vmatpush1.msra.mxu0 %v282
        %363 = vmatprep.subr.mxu0 0.0
        %364 = vmatpush1.msra.mxu0 %v281
        %365 = vmatprep.subr.mxu0 0.0
        %366 = vmatpush1.msra.mxu0 %v280
        %367 = vmatprep.subr.mxu0 0.0
        %368 = vmatpush1.msra.mxu0 %v279
        %369 = vmatprep.subr.mxu0 0.0
        %370 = vmatpush1.msra.mxu0 %v278
        %371 = vmatprep.subr.mxu0 0.0
        %372 = vmatpush1.msra.mxu0 %v277
        %373 = vmatprep.subr.mxu0 0.0
        %374 = vmatpush1.msra.mxu0 %v276
        %375 = vmatprep.subr.mxu0 0.0
        %376 = vmatpush1.msra.mxu0 %v275
        %377 = vmatprep.subr.mxu0 0.0
        %378 = vmatpush1.msra.mxu0 %v274
        %379 = vmatprep.subr.mxu0 0.0
        %380 = vmatpush1.msra.mxu0 %v273
        %381 = vmatprep.subr.mxu0 0.0
        %382 = vmatpush1.msra.mxu0 %v272
        %383 = vmatprep.subr.mxu0 0.0
        %384 = vmatpush1.msra.mxu0 %v271
        %385 = vmatprep.subr.mxu0 0.0
        %386 = vmatpush1.msra.mxu0 %v270
        %387 = vmatprep.subr.mxu0 0.0
        %388 = vmatpush1.msra.mxu0 %v269
        %389 = vmatprep.subr.mxu0 0.0
        %390 = vmatpush1.msra.mxu0 %v268
        %391 = vmatprep.subr.mxu0 0.0
        %392 = vmatpush2.msra.mxu0 0.0
        %393 = vmatprep.subr.mxu0 0.0
        %394 = vmatpush2.msra.mxu0 0.0
        %395 = vmatprep.subr.mxu0 0.0
        %396 = vmatpush2.msra.mxu0 0.0
        %397 = vmatprep.subr.mxu0 0.0
        %398 = vmatpush2.msra.mxu0 0.0
        %399 = vmatprep.subr.mxu0 0.0
        %400 = vmatpush2.msra.mxu0 0.0
        %401 = vmatprep.subr.mxu0 0.0
        %402 = vmatpush2.msra.mxu0 0.0
        %403 = vmatprep.subr.mxu0 0.0
        %404 = vmatpush2.msra.mxu0 0.0
        %405 = vmatprep.subr.mxu0 0.0
        %406 = vmatpush2.msra.mxu0 0.0
        %407 = vmatprep.subr.mxu0 0.0
        %408 = vmatpush2.msra.mxu0 0.0
        %409 = vmatprep.subr.mxu0 0.0
        %410 = vmatpush2.msra.mxu0 0.0
        %411 = vmatprep.subr.mxu0 0.0
        %412 = vmatpush2.msra.mxu0 0.0
        %413 = vmatprep.subr.mxu0 0.0
        %414 = vmatpush2.msra.mxu0 0.0
        %415 = vmatprep.subr.mxu0 0.0
        %416 = vmatpush2.msra.mxu0 0.0
        %417 = vmatprep.subr.mxu0 0.0
        %418 = vmatpush2.msra.mxu0 0.0
        %419 = vmatprep.subr.mxu0 0.0
        %420 = vmatpush2.msra.mxu0 0.0
        %421 = vmatprep.subr.mxu0 0.0
        %422 = vmatpush2.msra.mxu0 0.0
        %423 = vmatprep.mubr.f32.mxu0 0.0
        %424 = vmatmul.mubr.f32.gmra.mxu0 %v232
        %v425 = vpop.f32.mrf.mxu0
        %v426 = vadd.f32 %v351, %v425
        %v427 = vpop.f32.mrf.mxu0
        %428 = vmatprep.mubr.f32.mxu0 0.0
        %429 = vmatmul.mubr.f32.gmra.mxu0 %v235
        %v430 = vpop.f32.mrf.mxu0
        %v431 = vadd.f32 %v356, %v430
        %v432 = vpop.f32.mrf.mxu0
        %433 = vdwg.mxu0
        %v434 = vld [vmem:[#allocation7] sm:$0x3]
        %v435 = vlaneseq
        %v436 = vshrl.u32 %v435, 7
        %v437 = vsub.s32 0, %v436
        %v438 = vrot.slane %v434, %v437
        %v439 = vmul.f32 %v426, %v438
        %v440 = vmul.f32 %v431, %v438
        %v441 = vlaneseq
        %v442 = vshrl.u32 %v441, 7
        %v443 = vsub.s32 1, %v442
        %v444 = vrot.slane %v434, %v443
        %v445 = vadd.f32 %v439, %v444
        %v446 = vadd.f32 %v440, %v444
        %v447 = vmax.f32 %v445, 0.0
        %v448 = vmax.f32 %v446, 0.0
        %v451 = vrot.slane %v447, 7
        %v452 = vrot.slane %v448, 7
        %v453 = vsel %vm222, %v451, %v452
        %v456 = vsel %vm222, 0.0, %v451
        %v457 = vrot.slane %v447, 1
        %v458 = vrot.slane %v448, 1
        %v459 = vsel %vm229, %v457, %v458
        %v462 = vsel %vm229, %v458, 0.0
        %s463 = scalar_lea.vmem [#allocation5], 384
        %v464 = vld [vmem:[%s463] sm:$0xff]
        %v465 = vld [vmem:[%s463 + $0x8] sm:$0xff]
        %v466 = vld [vmem:[%s463 + $0x10] sm:$0xff]
        %v467 = vld [vmem:[%s463 + $0x18] sm:$0xff]
        %v468 = vld [vmem:[%s463 + $0x20] sm:$0xff]
        %v469 = vld [vmem:[%s463 + $0x28] sm:$0xff]
        %v470 = vld [vmem:[%s463 + $0x30] sm:$0xff]
        %v471 = vld [vmem:[%s463 + $0x38] sm:$0xff]
        %v472 = vld [vmem:[%s463 + $0x40] sm:$0xff]
        %v473 = vld [vmem:[%s463 + $0x48] sm:$0xff]
        %v474 = vld [vmem:[%s463 + $0x50] sm:$0xff]
        %v475 = vld [vmem:[%s463 + $0x58] sm:$0xff]
        %v476 = vld [vmem:[%s463 + $0x60] sm:$0xff]
        %v477 = vld [vmem:[%s463 + $0x68] sm:$0xff]
        %v478 = vld [vmem:[%s463 + $0x70] sm:$0xff]
        %v479 = vld [vmem:[%s463 + $0x78] sm:$0xff]
        %v480 = vld [vmem:[%s463 + $0x80] sm:$0xff]
        %v481 = vld [vmem:[%s463 + $0x88] sm:$0xff]
        %v482 = vld [vmem:[%s463 + $0x90] sm:$0xff]
        %v483 = vld [vmem:[%s463 + $0x98] sm:$0xff]
        %v484 = vld [vmem:[%s463 + $0xa0] sm:$0xff]
        %v485 = vld [vmem:[%s463 + $0xa8] sm:$0xff]
        %v486 = vld [vmem:[%s463 + $0xb0] sm:$0xff]
        %v487 = vld [vmem:[%s463 + $0xb8] sm:$0xff]
        %v488 = vld [vmem:[%s463 + $0xc0] sm:$0xff]
        %v489 = vld [vmem:[%s463 + $0xc8] sm:$0xff]
        %v490 = vld [vmem:[%s463 + $0xd0] sm:$0xff]
        %v491 = vld [vmem:[%s463 + $0xd8] sm:$0xff]
        %v492 = vld [vmem:[%s463 + $0xe0] sm:$0xff]
        %v493 = vld [vmem:[%s463 + $0xe8] sm:$0xff]
        %v494 = vld [vmem:[%s463 + $0xf0] sm:$0xff]
        %v495 = vld [vmem:[%s463 + $0xf8] sm:$0xff]
        %v496 = vld [vmem:[%s463 + $0x100] sm:$0xff]
        %v497 = vld [vmem:[%s463 + $0x108] sm:$0xff]
        %v498 = vld [vmem:[%s463 + $0x110] sm:$0xff]
        %v499 = vld [vmem:[%s463 + $0x118] sm:$0xff]
        %v500 = vld [vmem:[%s463 + $0x120] sm:$0xff]
        %v501 = vld [vmem:[%s463 + $0x128] sm:$0xff]
        %v502 = vld [vmem:[%s463 + $0x130] sm:$0xff]
        %v503 = vld [vmem:[%s463 + $0x138] sm:$0xff]
        %v504 = vld [vmem:[%s463 + $0x140] sm:$0xff]
        %v505 = vld [vmem:[%s463 + $0x148] sm:$0xff]
        %v506 = vld [vmem:[%s463 + $0x150] sm:$0xff]
        %v507 = vld [vmem:[%s463 + $0x158] sm:$0xff]
        %v508 = vld [vmem:[%s463 + $0x160] sm:$0xff]
        %v509 = vld [vmem:[%s463 + $0x168] sm:$0xff]
        %v510 = vld [vmem:[%s463 + $0x170] sm:$0xff]
        %v511 = vld [vmem:[%s463 + $0x178] sm:$0xff]
        %512 = vmatprep.subr.mxu0 0.0
        %513 = vmatpush1.msra.mxu0 %v479
        %514 = vmatprep.subr.mxu0 0.0
        %515 = vmatpush1.msra.mxu0 %v478
        %516 = vmatprep.subr.mxu0 0.0
        %517 = vmatpush1.msra.mxu0 %v477
        %518 = vmatprep.subr.mxu0 0.0
        %519 = vmatpush1.msra.mxu0 %v476
        %520 = vmatprep.subr.mxu0 0.0
        %521 = vmatpush1.msra.mxu0 %v475
        %522 = vmatprep.subr.mxu0 0.0
        %523 = vmatpush1.msra.mxu0 %v474
        %524 = vmatprep.subr.mxu0 0.0
        %525 = vmatpush1.msra.mxu0 %v473
        %526 = vmatprep.subr.mxu0 0.0
        %527 = vmatpush1.msra.mxu0 %v472
        %528 = vmatprep.subr.mxu0 0.0
        %529 = vmatpush1.msra.mxu0 %v471
        %530 = vmatprep.subr.mxu0 0.0
        %531 = vmatpush1.msra.mxu0 %v470
        %532 = vmatprep.subr.mxu0 0.0
        %533 = vmatpush1.msra.mxu0 %v469
        %534 = vmatprep.subr.mxu0 0.0
        %535 = vmatpush1.msra.mxu0 %v468
        %536 = vmatprep.subr.mxu0 0.0
        %537 = vmatpush1.msra.mxu0 %v467
        %538 = vmatprep.subr.mxu0 0.0
        %539 = vmatpush1.msra.mxu0 %v466
        %540 = vmatprep.subr.mxu0 0.0
        %541 = vmatpush1.msra.mxu0 %v465
        %542 = vmatprep.subr.mxu0 0.0
        %543 = vmatpush1.msra.mxu0 %v464
        %544 = vmatprep.subr.mxu0 0.0
        %545 = vmatpush2.msra.mxu0 %v495
        %546 = vmatprep.subr.mxu0 0.0
        %547 = vmatpush2.msra.mxu0 %v494
        %548 = vmatprep.subr.mxu0 0.0
        %549 = vmatpush2.msra.mxu0 %v493
        %550 = vmatprep.subr.mxu0 0.0
        %551 = vmatpush2.msra.mxu0 %v492
        %552 = vmatprep.subr.mxu0 0.0
        %553 = vmatpush2.msra.mxu0 %v491
        %554 = vmatprep.subr.mxu0 0.0
        %555 = vmatpush2.msra.mxu0 %v490
        %556 = vmatprep.subr.mxu0 0.0
        %557 = vmatpush2.msra.mxu0 %v489
        %558 = vmatprep.subr.mxu0 0.0
        %559 = vmatpush2.msra.mxu0 %v488
        %560 = vmatprep.subr.mxu0 0.0
        %561 = vmatpush2.msra.mxu0 %v487
        %562 = vmatprep.subr.mxu0 0.0
        %563 = vmatpush2.msra.mxu0 %v486
        %564 = vmatprep.subr.mxu0 0.0
        %565 = vmatpush2.msra.mxu0 %v485
        %566 = vmatprep.subr.mxu0 0.0
        %567 = vmatpush2.msra.mxu0 %v484
        %568 = vmatprep.subr.mxu0 0.0
        %569 = vmatpush2.msra.mxu0 %v483
        %570 = vmatprep.subr.mxu0 0.0
        %571 = vmatpush2.msra.mxu0 %v482
        %572 = vmatprep.subr.mxu0 0.0
        %573 = vmatpush2.msra.mxu0 %v481
        %574 = vmatprep.subr.mxu0 0.0
        %575 = vmatpush2.msra.mxu0 %v480
        %576 = vmatprep.mubr.f32.mxu0 %v447
        %577 = vmatmul.mubr.f32.gmra.mxu0 %v456
        %v578 = vpop.f32.mrf.mxu0
        %v579 = vadd.f32 0.0, %v578
        %v580 = vpop.f32.mrf.mxu0
        %581 = vmatprep.mubr.f32.mxu0 %v448
        %582 = vmatmul.mubr.f32.gmra.mxu0 %v453
        %v583 = vpop.f32.mrf.mxu0
        %v584 = vadd.f32 0.0, %v583
        %v585 = vpop.f32.mrf.mxu0
        %586 = vdwg.mxu0
        %587 = vmatprep.subr.mxu0 0.0
        %588 = vmatpush1.msra.mxu0 %v511
        %589 = vmatprep.subr.mxu0 0.0
        %590 = vmatpush1.msra.mxu0 %v510
        %591 = vmatprep.subr.mxu0 0.0
        %592 = vmatpush1.msra.mxu0 %v509
        %593 = vmatprep.subr.mxu0 0.0
        %594 = vmatpush1.msra.mxu0 %v508
        %595 = vmatprep.subr.mxu0 0.0
        %596 = vmatpush1.msra.mxu0 %v507
        %597 = vmatprep.subr.mxu0 0.0
        %598 = vmatpush1.msra.mxu0 %v506
        %599 = vmatprep.subr.mxu0 0.0
        %600 = vmatpush1.msra.mxu0 %v505
        %601 = vmatprep.subr.mxu0 0.0
        %602 = vmatpush1.msra.mxu0 %v504
        %603 = vmatprep.subr.mxu0 0.0
        %604 = vmatpush1.msra.mxu0 %v503
        %605 = vmatprep.subr.mxu0 0.0
        %606 = vmatpush1.msra.mxu0 %v502
        %607 = vmatprep.subr.mxu0 0.0
        %608 = vmatpush1.msra.mxu0 %v501
        %609 = vmatprep.subr.mxu0 0.0
        %610 = vmatpush1.msra.mxu0 %v500
        %611 = vmatprep.subr.mxu0 0.0
        %612 = vmatpush1.msra.mxu0 %v499
        %613 = vmatprep.subr.mxu0 0.0
        %614 = vmatpush1.msra.mxu0 %v498
        %615 = vmatprep.subr.mxu0 0.0
        %616 = vmatpush1.msra.mxu0 %v497
        %617 = vmatprep.subr.mxu0 0.0
        %618 = vmatpush1.msra.mxu0 %v496
        %619 = vmatprep.subr.mxu0 0.0
        %620 = vmatpush2.msra.mxu0 0.0
        %621 = vmatprep.subr.mxu0 0.0
        %622 = vmatpush2.msra.mxu0 0.0
        %623 = vmatprep.subr.mxu0 0.0
        %624 = vmatpush2.msra.mxu0 0.0
        %625 = vmatprep.subr.mxu0 0.0
        %626 = vmatpush2.msra.mxu0 0.0
        %627 = vmatprep.subr.mxu0 0.0
        %628 = vmatpush2.msra.mxu0 0.0
        %629 = vmatprep.subr.mxu0 0.0
        %630 = vmatpush2.msra.mxu0 0.0
        %631 = vmatprep.subr.mxu0 0.0
        %632 = vmatpush2.msra.mxu0 0.0
        %633 = vmatprep.subr.mxu0 0.0
        %634 = vmatpush2.msra.mxu0 0.0
        %635 = vmatprep.subr.mxu0 0.0
        %636 = vmatpush2.msra.mxu0 0.0
        %637 = vmatprep.subr.mxu0 0.0
        %638 = vmatpush2.msra.mxu0 0.0
        %639 = vmatprep.subr.mxu0 0.0
        %640 = vmatpush2.msra.mxu0 0.0
        %641 = vmatprep.subr.mxu0 0.0
        %642 = vmatpush2.msra.mxu0 0.0
        %643 = vmatprep.subr.mxu0 0.0
        %644 = vmatpush2.msra.mxu0 0.0
        %645 = vmatprep.subr.mxu0 0.0
        %646 = vmatpush2.msra.mxu0 0.0
        %647 = vmatprep.subr.mxu0 0.0
        %648 = vmatpush2.msra.mxu0 0.0
        %649 = vmatprep.subr.mxu0 0.0
        %650 = vmatpush2.msra.mxu0 0.0
        %651 = vmatprep.mubr.f32.mxu0 0.0
        %652 = vmatmul.mubr.f32.gmra.mxu0 %v459
        %v653 = vpop.f32.mrf.mxu0
        %v654 = vadd.f32 %v579, %v653
        %v655 = vpop.f32.mrf.mxu0
        %656 = vmatprep.mubr.f32.mxu0 0.0
        %657 = vmatmul.mubr.f32.gmra.mxu0 %v462
        %v658 = vpop.f32.mrf.mxu0
        %v659 = vadd.f32 %v584, %v658
        %v660 = vpop.f32.mrf.mxu0
        %661 = vdwg.mxu0
        %s662 = scalar_lea.vmem [#allocation7], 2
        %v663 = vld [vmem:[%s662] sm:$0x3]
        %v664 = vlaneseq
        %v665 = vshrl.u32 %v664, 7
        %v666 = vsub.s32 0, %v665
        %v667 = vrot.slane %v663, %v666
        %v668 = vmul.f32 %v654, %v667
        %v669 = vmul.f32 %v659, %v667
        %v670 = vlaneseq
        %v671 = vshrl.u32 %v670, 7
        %v672 = vsub.s32 1, %v671
        %v673 = vrot.slane %v663, %v672
        %v674 = vadd.f32 %v668, %v673
        %v675 = vadd.f32 %v669, %v673
        %v676 = vadd.f32 %v674, %v218
        %v677 = vadd.f32 %v675, %v219
        %v678 = vmax.f32 %v676, 0.0
        %v679 = vmax.f32 %v677, 0.0
        %v682 = vrot.slane %v678, 7
        %v683 = vrot.slane %v679, 7
        %v684 = vsel %vm222, %v682, %v683
        %v687 = vsel %vm222, 0.0, %v682
        %v688 = vrot.slane %v678, 1
        %v689 = vrot.slane %v679, 1
        %v690 = vsel %vm229, %v688, %v689
        %v693 = vsel %vm229, %v689, 0.0
        %s694 = scalar_lea.vmem [#allocation5], 768
        %v695 = vld [vmem:[%s694] sm:$0xff]
        %v696 = vld [vmem:[%s694 + $0x8] sm:$0xff]
        %v697 = vld [vmem:[%s694 + $0x10] sm:$0xff]
        %v698 = vld [vmem:[%s694 + $0x18] sm:$0xff]
        %v699 = vld [vmem:[%s694 + $0x20] sm:$0xff]
        %v700 = vld [vmem:[%s694 + $0x28] sm:$0xff]
        %v701 = vld [vmem:[%s694 + $0x30] sm:$0xff]
        %v702 = vld [vmem:[%s694 + $0x38] sm:$0xff]
        %v703 = vld [vmem:[%s694 + $0x40] sm:$0xff]
        %v704 = vld [vmem:[%s694 + $0x48] sm:$0xff]
        %v705 = vld [vmem:[%s694 + $0x50] sm:$0xff]
        %v706 = vld [vmem:[%s694 + $0x58] sm:$0xff]
        %v707 = vld [vmem:[%s694 + $0x60] sm:$0xff]
        %v708 = vld [vmem:[%s694 + $0x68] sm:$0xff]
        %v709 = vld [vmem:[%s694 + $0x70] sm:$0xff]
        %v710 = vld [vmem:[%s694 + $0x78] sm:$0xff]
        %v711 = vld [vmem:[%s694 + $0x80] sm:$0xff]
        %v712 = vld [vmem:[%s694 + $0x88] sm:$0xff]
        %v713 = vld [vmem:[%s694 + $0x90] sm:$0xff]
        %v714 = vld [vmem:[%s694 + $0x98] sm:$0xff]
        %v715 = vld [vmem:[%s694 + $0xa0] sm:$0xff]
        %v716 = vld [vmem:[%s694 + $0xa8] sm:$0xff]
        %v717 = vld [vmem:[%s694 + $0xb0] sm:$0xff]
        %v718 = vld [vmem:[%s694 + $0xb8] sm:$0xff]
        %v719 = vld [vmem:[%s694 + $0xc0] sm:$0xff]
        %v720 = vld [vmem:[%s694 + $0xc8] sm:$0xff]
        %v721 = vld [vmem:[%s694 + $0xd0] sm:$0xff]
        %v722 = vld [vmem:[%s694 + $0xd8] sm:$0xff]
        %v723 = vld [vmem:[%s694 + $0xe0] sm:$0xff]
        %v724 = vld [vmem:[%s694 + $0xe8] sm:$0xff]
        %v725 = vld [vmem:[%s694 + $0xf0] sm:$0xff]
        %v726 = vld [vmem:[%s694 + $0xf8] sm:$0xff]
        %v727 = vld [vmem:[%s694 + $0x100] sm:$0xff]
        %v728 = vld [vmem:[%s694 + $0x108] sm:$0xff]
        %v729 = vld [vmem:[%s694 + $0x110] sm:$0xff]
        %v730 = vld [vmem:[%s694 + $0x118] sm:$0xff]
        %v731 = vld [vmem:[%s694 + $0x120] sm:$0xff]
        %v732 = vld [vmem:[%s694 + $0x128] sm:$0xff]
        %v733 = vld [vmem:[%s694 + $0x130] sm:$0xff]
        %v734 = vld [vmem:[%s694 + $0x138] sm:$0xff]
        %v735 = vld [vmem:[%s694 + $0x140] sm:$0xff]
        %v736 = vld [vmem:[%s694 + $0x148] sm:$0xff]
        %v737 = vld [vmem:[%s694 + $0x150] sm:$0xff]
        %v738 = vld [vmem:[%s694 + $0x158] sm:$0xff]
        %v739 = vld [vmem:[%s694 + $0x160] sm:$0xff]
        %v740 = vld [vmem:[%s694 + $0x168] sm:$0xff]
        %v741 = vld [vmem:[%s694 + $0x170] sm:$0xff]
        %v742 = vld [vmem:[%s694 + $0x178] sm:$0xff]
        %743 = vmatprep.subr.mxu0 0.0
        %744 = vmatpush1.msra.mxu0 %v710
        %745 = vmatprep.subr.mxu0 0.0
        %746 = vmatpush1.msra.mxu0 %v709
        %747 = vmatprep.subr.mxu0 0.0
        %748 = vmatpush1.msra.mxu0 %v708
        %749 = vmatprep.subr.mxu0 0.0
        %750 = vmatpush1.msra.mxu0 %v707
        %751 = vmatprep.subr.mxu0 0.0
        %752 = vmatpush1.msra.mxu0 %v706
        %753 = vmatprep.subr.mxu0 0.0
        %754 = vmatpush1.msra.mxu0 %v705
        %755 = vmatprep.subr.mxu0 0.0
        %756 = vmatpush1.msra.mxu0 %v704
        %757 = vmatprep.subr.mxu0 0.0
        %758 = vmatpush1.msra.mxu0 %v703
        %759 = vmatprep.subr.mxu0 0.0
        %760 = vmatpush1.msra.mxu0 %v702
        %761 = vmatprep.subr.mxu0 0.0
        %762 = vmatpush1.msra.mxu0 %v701
        %763 = vmatprep.subr.mxu0 0.0
        %764 = vmatpush1.msra.mxu0 %v700
        %765 = vmatprep.subr.mxu0 0.0
        %766 = vmatpush1.msra.mxu0 %v699
        %767 = vmatprep.subr.mxu0 0.0
        %768 = vmatpush1.msra.mxu0 %v698
        %769 = vmatprep.subr.mxu0 0.0
        %770 = vmatpush1.msra.mxu0 %v697
        %771 = vmatprep.subr.mxu0 0.0
        %772 = vmatpush1.msra.mxu0 %v696
        %773 = vmatprep.subr.mxu0 0.0
        %774 = vmatpush1.msra.mxu0 %v695
        %775 = vmatprep.subr.mxu0 0.0
        %776 = vmatpush2.msra.mxu0 %v726
        %777 = vmatprep.subr.mxu0 0.0
        %778 = vmatpush2.msra.mxu0 %v725
        %779 = vmatprep.subr.mxu0 0.0
        %780 = vmatpush2.msra.mxu0 %v724
        %781 = vmatprep.subr.mxu0 0.0
        %782 = vmatpush2.msra.mxu0 %v723
        %783 = vmatprep.subr.mxu0 0.0
        %784 = vmatpush2.msra.mxu0 %v722
        %785 = vmatprep.subr.mxu0 0.0
        %786 = vmatpush2.msra.mxu0 %v721
        %787 = vmatprep.subr.mxu0 0.0
        %788 = vmatpush2.msra.mxu0 %v720
        %789 = vmatprep.subr.mxu0 0.0
        %790 = vmatpush2.msra.mxu0 %v719
        %791 = vmatprep.subr.mxu0 0.0
        %792 = vmatpush2.msra.mxu0 %v718
        %793 = vmatprep.subr.mxu0 0.0
        %794 = vmatpush2.msra.mxu0 %v717
        %795 = vmatprep.subr.mxu0 0.0
        %796 = vmatpush2.msra.mxu0 %v716
        %797 = vmatprep.subr.mxu0 0.0
        %798 = vmatpush2.msra.mxu0 %v715
        %799 = vmatprep.subr.mxu0 0.0
        %800 = vmatpush2.msra.mxu0 %v714
        %801 = vmatprep.subr.mxu0 0.0
        %802 = vmatpush2.msra.mxu0 %v713
        %803 = vmatprep.subr.mxu0 0.0
        %804 = vmatpush2.msra.mxu0 %v712
        %805 = vmatprep.subr.mxu0 0.0
        %806 = vmatpush2.msra.mxu0 %v711
        %807 = vmatprep.mubr.f32.mxu0 %v678
        %808 = vmatmul.mubr.f32.gmra.mxu0 %v687
        %v809 = vpop.f32.mrf.mxu0
        %v810 = vadd.f32 0.0, %v809
        %v811 = vpop.f32.mrf.mxu0
        %812 = vmatprep.mubr.f32.mxu0 %v679
        %813 = vmatmul.mubr.f32.gmra.mxu0 %v684
        %v814 = vpop.f32.mrf.mxu0
        %v815 = vadd.f32 0.0, %v814
        %v816 = vpop.f32.mrf.mxu0
        %817 = vdwg.mxu0
        %818 = vmatprep.subr.mxu0 0.0
        %819 = vmatpush1.msra.mxu0 %v742
        %820 = vmatprep.subr.mxu0 0.0
        %821 = vmatpush1.msra.mxu0 %v741
        %822 = vmatprep.subr.mxu0 0.0
        %823 = vmatpush1.msra.mxu0 %v740
        %824 = vmatprep.subr.mxu0 0.0
        %825 = vmatpush1.msra.mxu0 %v739
        %826 = vmatprep.subr.mxu0 0.0
        %827 = vmatpush1.msra.mxu0 %v738
        %828 = vmatprep.subr.mxu0 0.0
        %829 = vmatpush1.msra.mxu0 %v737
        %830 = vmatprep.subr.mxu0 0.0
        %831 = vmatpush1.msra.mxu0 %v736
        %832 = vmatprep.subr.mxu0 0.0
        %833 = vmatpush1.msra.mxu0 %v735
        %834 = vmatprep.subr.mxu0 0.0
        %835 = vmatpush1.msra.mxu0 %v734
        %836 = vmatprep.subr.mxu0 0.0
        %837 = vmatpush1.msra.mxu0 %v733
        %838 = vmatprep.subr.mxu0 0.0
        %839 = vmatpush1.msra.mxu0 %v732
        %840 = vmatprep.subr.mxu0 0.0
        %841 = vmatpush1.msra.mxu0 %v731
        %842 = vmatprep.subr.mxu0 0.0
        %843 = vmatpush1.msra.mxu0 %v730
        %844 = vmatprep.subr.mxu0 0.0
        %845 = vmatpush1.msra.mxu0 %v729
        %846 = vmatprep.subr.mxu0 0.0
        %847 = vmatpush1.msra.mxu0 %v728
        %848 = vmatprep.subr.mxu0 0.0
        %849 = vmatpush1.msra.mxu0 %v727
        %850 = vmatprep.subr.mxu0 0.0
        %851 = vmatpush2.msra.mxu0 0.0
        %852 = vmatprep.subr.mxu0 0.0
        %853 = vmatpush2.msra.mxu0 0.0
        %854 = vmatprep.subr.mxu0 0.0
        %855 = vmatpush2.msra.mxu0 0.0
        %856 = vmatprep.subr.mxu0 0.0
        %857 = vmatpush2.msra.mxu0 0.0
        %858 = vmatprep.subr.mxu0 0.0
        %859 = vmatpush2.msra.mxu0 0.0
        %860 = vmatprep.subr.mxu0 0.0
        %861 = vmatpush2.msra.mxu0 0.0
        %862 = vmatprep.subr.mxu0 0.0
        %863 = vmatpush2.msra.mxu0 0.0
        %864 = vmatprep.subr.mxu0 0.0
        %865 = vmatpush2.msra.mxu0 0.0
        %866 = vmatprep.subr.mxu0 0.0
        %867 = vmatpush2.msra.mxu0 0.0
        %868 = vmatprep.subr.mxu0 0.0
        %869 = vmatpush2.msra.mxu0 0.0
        %870 = vmatprep.subr.mxu0 0.0
        %871 = vmatpush2.msra.mxu0 0.0
        %872 = vmatprep.subr.mxu0 0.0
        %873 = vmatpush2.msra.mxu0 0.0
        %874 = vmatprep.subr.mxu0 0.0
        %875 = vmatpush2.msra.mxu0 0.0
        %876 = vmatprep.subr.mxu0 0.0
        %877 = vmatpush2.msra.mxu0 0.0
        %878 = vmatprep.subr.mxu0 0.0
        %879 = vmatpush2.msra.mxu0 0.0
        %880 = vmatprep.subr.mxu0 0.0
        %881 = vmatpush2.msra.mxu0 0.0
        %882 = vmatprep.mubr.f32.mxu0 0.0
        %883 = vmatmul.mubr.f32.gmra.mxu0 %v690
        %v884 = vpop.f32.mrf.mxu0
        %v885 = vadd.f32 %v810, %v884
        %v886 = vpop.f32.mrf.mxu0
        %887 = vmatprep.mubr.f32.mxu0 0.0
        %888 = vmatmul.mubr.f32.gmra.mxu0 %v693
        %v889 = vpop.f32.mrf.mxu0
        %v890 = vadd.f32 %v815, %v889
        %v891 = vpop.f32.mrf.mxu0
        %892 = vdwg.mxu0
        %s893 = scalar_lea.vmem [#allocation7], 4
        %v894 = vld [vmem:[%s893] sm:$0x3]
        %v895 = vlaneseq
        %v896 = vshrl.u32 %v895, 7
        %v897 = vsub.s32 0, %v896
        %v898 = vrot.slane %v894, %v897
        %v899 = vmul.f32 %v885, %v898
        %v900 = vmul.f32 %v890, %v898
        %v901 = vlaneseq
        %v902 = vshrl.u32 %v901, 7
        %v903 = vsub.s32 1, %v902
        %v904 = vrot.slane %v894, %v903
        %v905 = vadd.f32 %v899, %v904
        %v906 = vadd.f32 %v900, %v904
        %v907 = vmax.f32 %v905, 0.0
        %v908 = vmax.f32 %v906, 0.0
        %v911 = vrot.slane %v907, 7
        %v912 = vrot.slane %v908, 7
        %v913 = vsel %vm222, %v911, %v912
        %v916 = vsel %vm222, 0.0, %v911
        %v917 = vrot.slane %v907, 1
        %v918 = vrot.slane %v908, 1
        %v919 = vsel %vm229, %v917, %v918
        %v922 = vsel %vm229, %v918, 0.0
        %s923 = scalar_lea.vmem [#allocation5], 1152
        %v924 = vld [vmem:[%s923] sm:$0xff]
        %v925 = vld [vmem:[%s923 + $0x8] sm:$0xff]
        %v926 = vld [vmem:[%s923 + $0x10] sm:$0xff]
        %v927 = vld [vmem:[%s923 + $0x18] sm:$0xff]
        %v928 = vld [vmem:[%s923 + $0x20] sm:$0xff]
        %v929 = vld [vmem:[%s923 + $0x28] sm:$0xff]
        %v930 = vld [vmem:[%s923 + $0x30] sm:$0xff]
        %v931 = vld [vmem:[%s923 + $0x38] sm:$0xff]
        %v932 = vld [vmem:[%s923 + $0x40] sm:$0xff]
        %v933 = vld [vmem:[%s923 + $0x48] sm:$0xff]
        %v934 = vld [vmem:[%s923 + $0x50] sm:$0xff]
        %v935 = vld [vmem:[%s923 + $0x58] sm:$0xff]
        %v936 = vld [vmem:[%s923 + $0x60] sm:$0xff]
        %v937 = vld [vmem:[%s923 + $0x68] sm:$0xff]
        %v938 = vld [vmem:[%s923 + $0x70] sm:$0xff]
        %v939 = vld [vmem:[%s923 + $0x78] sm:$0xff]
        %v940 = vld [vmem:[%s923 + $0x80] sm:$0xff]
        %v941 = vld [vmem:[%s923 + $0x88] sm:$0xff]
        %v942 = vld [vmem:[%s923 + $0x90] sm:$0xff]
        %v943 = vld [vmem:[%s923 + $0x98] sm:$0xff]
        %v944 = vld [vmem:[%s923 + $0xa0] sm:$0xff]
        %v945 = vld [vmem:[%s923 + $0xa8] sm:$0xff]
        %v946 = vld [vmem:[%s923 + $0xb0] sm:$0xff]
        %v947 = vld [vmem:[%s923 + $0xb8] sm:$0xff]
        %v948 = vld [vmem:[%s923 + $0xc0] sm:$0xff]
        %v949 = vld [vmem:[%s923 + $0xc8] sm:$0xff]
        %v950 = vld [vmem:[%s923 + $0xd0] sm:$0xff]
        %v951 = vld [vmem:[%s923 + $0xd8] sm:$0xff]
        %v952 = vld [vmem:[%s923 + $0xe0] sm:$0xff]
        %v953 = vld [vmem:[%s923 + $0xe8] sm:$0xff]
        %v954 = vld [vmem:[%s923 + $0xf0] sm:$0xff]
        %v955 = vld [vmem:[%s923 + $0xf8] sm:$0xff]
        %v956 = vld [vmem:[%s923 + $0x100] sm:$0xff]
        %v957 = vld [vmem:[%s923 + $0x108] sm:$0xff]
        %v958 = vld [vmem:[%s923 + $0x110] sm:$0xff]
        %v959 = vld [vmem:[%s923 + $0x118] sm:$0xff]
        %v960 = vld [vmem:[%s923 + $0x120] sm:$0xff]
        %v961 = vld [vmem:[%s923 + $0x128] sm:$0xff]
        %v962 = vld [vmem:[%s923 + $0x130] sm:$0xff]
        %v963 = vld [vmem:[%s923 + $0x138] sm:$0xff]
        %v964 = vld [vmem:[%s923 + $0x140] sm:$0xff]
        %v965 = vld [vmem:[%s923 + $0x148] sm:$0xff]
        %v966 = vld [vmem:[%s923 + $0x150] sm:$0xff]
        %v967 = vld [vmem:[%s923 + $0x158] sm:$0xff]
        %v968 = vld [vmem:[%s923 + $0x160] sm:$0xff]
        %v969 = vld [vmem:[%s923 + $0x168] sm:$0xff]
        %v970 = vld [vmem:[%s923 + $0x170] sm:$0xff]
        %v971 = vld [vmem:[%s923 + $0x178] sm:$0xff]
        %972 = vmatprep.subr.mxu0 0.0
        %973 = vmatpush1.msra.mxu0 %v939
        %974 = vmatprep.subr.mxu0 0.0
        %975 = vmatpush1.msra.mxu0 %v938
        %976 = vmatprep.subr.mxu0 0.0
        %977 = vmatpush1.msra.mxu0 %v937
        %978 = vmatprep.subr.mxu0 0.0
        %979 = vmatpush1.msra.mxu0 %v936
        %980 = vmatprep.subr.mxu0 0.0
        %981 = vmatpush1.msra.mxu0 %v935
        %982 = vmatprep.subr.mxu0 0.0
        %983 = vmatpush1.msra.mxu0 %v934
        %984 = vmatprep.subr.mxu0 0.0
        %985 = vmatpush1.msra.mxu0 %v933
        %986 = vmatprep.subr.mxu0 0.0
        %987 = vmatpush1.msra.mxu0 %v932
        %988 = vmatprep.subr.mxu0 0.0
        %989 = vmatpush1.msra.mxu0 %v931
        %990 = vmatprep.subr.mxu0 0.0
        %991 = vmatpush1.msra.mxu0 %v930
        %992 = vmatprep.subr.mxu0 0.0
        %993 = vmatpush1.msra.mxu0 %v929
        %994 = vmatprep.subr.mxu0 0.0
        %995 = vmatpush1.msra.mxu0 %v928
        %996 = vmatprep.subr.mxu0 0.0
        %997 = vmatpush1.msra.mxu0 %v927
        %998 = vmatprep.subr.mxu0 0.0
        %999 = vmatpush1.msra.mxu0 %v926
        %1000 = vmatprep.subr.mxu0 0.0
        %1001 = vmatpush1.msra.mxu0 %v925
        %1002 = vmatprep.subr.mxu0 0.0
        %1003 = vmatpush1.msra.mxu0 %v924
        %1004 = vmatprep.subr.mxu0 0.0
        %1005 = vmatpush2.msra.mxu0 %v955
        %1006 = vmatprep.subr.mxu0 0.0
        %1007 = vmatpush2.msra.mxu0 %v954
        %1008 = vmatprep.subr.mxu0 0.0
        %1009 = vmatpush2.msra.mxu0 %v953
        %1010 = vmatprep.subr.mxu0 0.0
        %1011 = vmatpush2.msra.mxu0 %v952
        %1012 = vmatprep.subr.mxu0 0.0
        %1013 = vmatpush2.msra.mxu0 %v951
        %1014 = vmatprep.subr.mxu0 0.0
        %1015 = vmatpush2.msra.mxu0 %v950
        %1016 = vmatprep.subr.mxu0 0.0
        %1017 = vmatpush2.msra.mxu0 %v949
        %1018 = vmatprep.subr.mxu0 0.0
        %1019 = vmatpush2.msra.mxu0 %v948
        %1020 = vmatprep.subr.mxu0 0.0
        %1021 = vmatpush2.msra.mxu0 %v947
        %1022 = vmatprep.subr.mxu0 0.0
        %1023 = vmatpush2.msra.mxu0 %v946
        %1024 = vmatprep.subr.mxu0 0.0
        %1025 = vmatpush2.msra.mxu0 %v945
        %1026 = vmatprep.subr.mxu0 0.0
        %1027 = vmatpush2.msra.mxu0 %v944
        %1028 = vmatprep.subr.mxu0 0.0
        %1029 = vmatpush2.msra.mxu0 %v943
        %1030 = vmatprep.subr.mxu0 0.0
        %1031 = vmatpush2.msra.mxu0 %v942
        %1032 = vmatprep.subr.mxu0 0.0
        %1033 = vmatpush2.msra.mxu0 %v941
        %1034 = vmatprep.subr.mxu0 0.0
        %1035 = vmatpush2.msra.mxu0 %v940
        %1036 = vmatprep.mubr.f32.mxu0 %v907
        %1037 = vmatmul.mubr.f32.gmra.mxu0 %v916
        %v1038 = vpop.f32.mrf.mxu0
        %v1039 = vadd.f32 0.0, %v1038
        %v1040 = vpop.f32.mrf.mxu0
        %1041 = vmatprep.mubr.f32.mxu0 %v908
        %1042 = vmatmul.mubr.f32.gmra.mxu0 %v913
        %v1043 = vpop.f32.mrf.mxu0
        %v1044 = vadd.f32 0.0, %v1043
        %v1045 = vpop.f32.mrf.mxu0
        %1046 = vdwg.mxu0
        %1047 = vmatprep.subr.mxu0 0.0
        %1048 = vmatpush1.msra.mxu0 %v971
        %1049 = vmatprep.subr.mxu0 0.0
        %1050 = vmatpush1.msra.mxu0 %v970
        %1051 = vmatprep.subr.mxu0 0.0
        %1052 = vmatpush1.msra.mxu0 %v969
        %1053 = vmatprep.subr.mxu0 0.0
        %1054 = vmatpush1.msra.mxu0 %v968
        %1055 = vmatprep.subr.mxu0 0.0
        %1056 = vmatpush1.msra.mxu0 %v967
        %1057 = vmatprep.subr.mxu0 0.0
        %1058 = vmatpush1.msra.mxu0 %v966
        %1059 = vmatprep.subr.mxu0 0.0
        %1060 = vmatpush1.msra.mxu0 %v965
        %1061 = vmatprep.subr.mxu0 0.0
        %1062 = vmatpush1.msra.mxu0 %v964
        %1063 = vmatprep.subr.mxu0 0.0
        %1064 = vmatpush1.msra.mxu0 %v963
        %1065 = vmatprep.subr.mxu0 0.0
        %1066 = vmatpush1.msra.mxu0 %v962
        %1067 = vmatprep.subr.mxu0 0.0
        %1068 = vmatpush1.msra.mxu0 %v961
        %1069 = vmatprep.subr.mxu0 0.0
        %1070 = vmatpush1.msra.mxu0 %v960
        %1071 = vmatprep.subr.mxu0 0.0
        %1072 = vmatpush1.msra.mxu0 %v959
        %1073 = vmatprep.subr.mxu0 0.0
        %1074 = vmatpush1.msra.mxu0 %v958
        %1075 = vmatprep.subr.mxu0 0.0
        %1076 = vmatpush1.msra.mxu0 %v957
        %1077 = vmatprep.subr.mxu0 0.0
        %1078 = vmatpush1.msra.mxu0 %v956
        %1079 = vmatprep.subr.mxu0 0.0
        %1080 = vmatpush2.msra.mxu0 0.0
        %1081 = vmatprep.subr.mxu0 0.0
        %1082 = vmatpush2.msra.mxu0 0.0
        %1083 = vmatprep.subr.mxu0 0.0
        %1084 = vmatpush2.msra.mxu0 0.0
        %1085 = vmatprep.subr.mxu0 0.0
        %1086 = vmatpush2.msra.mxu0 0.0
        %1087 = vmatprep.subr.mxu0 0.0
        %1088 = vmatpush2.msra.mxu0 0.0
        %1089 = vmatprep.subr.mxu0 0.0
        %1090 = vmatpush2.msra.mxu0 0.0
        %1091 = vmatprep.subr.mxu0 0.0
        %1092 = vmatpush2.msra.mxu0 0.0
        %1093 = vmatprep.subr.mxu0 0.0
        %1094 = vmatpush2.msra.mxu0 0.0
        %1095 = vmatprep.subr.mxu0 0.0
        %1096 = vmatpush2.msra.mxu0 0.0
        %1097 = vmatprep.subr.mxu0 0.0
        %1098 = vmatpush2.msra.mxu0 0.0
        %1099 = vmatprep.subr.mxu0 0.0
        %1100 = vmatpush2.msra.mxu0 0.0
        %1101 = vmatprep.subr.mxu0 0.0
        %1102 = vmatpush2.msra.mxu0 0.0
        %1103 = vmatprep.subr.mxu0 0.0
        %1104 = vmatpush2.msra.mxu0 0.0
        %1105 = vmatprep.subr.mxu0 0.0
        %1106 = vmatpush2.msra.mxu0 0.0
        %1107 = vmatprep.subr.mxu0 0.0
        %1108 = vmatpush2.msra.mxu0 0.0
        %1109 = vmatprep.subr.mxu0 0.0
        %1110 = vmatpush2.msra.mxu0 0.0
        %1111 = vmatprep.mubr.f32.mxu0 0.0
        %1112 = vmatmul.mubr.f32.gmra.mxu0 %v919
        %v1113 = vpop.f32.mrf.mxu0
        %v1114 = vadd.f32 %v1039, %v1113
        %v1115 = vpop.f32.mrf.mxu0
        %1116 = vmatprep.mubr.f32.mxu0 0.0
        %1117 = vmatmul.mubr.f32.gmra.mxu0 %v922
        %v1118 = vpop.f32.mrf.mxu0
        %v1119 = vadd.f32 %v1044, %v1118
        %v1120 = vpop.f32.mrf.mxu0
        %1121 = vdwg.mxu0
        %s1122 = scalar_lea.vmem [#allocation7], 6
        %v1123 = vld [vmem:[%s1122] sm:$0x3]
        %v1124 = vlaneseq
        %v1125 = vshrl.u32 %v1124, 7
        %v1126 = vsub.s32 0, %v1125
        %v1127 = vrot.slane %v1123, %v1126
        %v1128 = vmul.f32 %v1114, %v1127
        %v1129 = vmul.f32 %v1119, %v1127
        %v1130 = vlaneseq
        %v1131 = vshrl.u32 %v1130, 7
        %v1132 = vsub.s32 1, %v1131
        %v1133 = vrot.slane %v1123, %v1132
        %v1134 = vadd.f32 %v1128, %v1133
        %v1135 = vadd.f32 %v1129, %v1133
        %v1136 = vadd.f32 %v1134, %v678
        %v1137 = vadd.f32 %v1135, %v679
        %v1138 = vmax.f32 %v1136, 0.0
        %v1139 = vmax.f32 %v1137, 0.0
        %1140 = vst [vmem:[%s217] sm:$0xff] %v1138
        %1141 = vst [vmem:[%s217 + $0x8] sm:$0xff] %v1139
        %s1142 = sand.u32 %s97, 1
        %s1143 = scalar_lea.sflag [#allocation4], %s1142
        %s1144 = sand.u32 %s97, 1
        %s1145 = smul.addr %s1144, 16
        %s1146 = scalar_lea.vmem [#allocation8], %s1145
        // Predicated region
        $region45: #{tpu_custom_call.1} parent=31 // pred_check
          %p1147 = pneg %p107
        $region46: #{tpu_custom_call.1} parent=31 // pred_check_branch
          %1149 = sbr.rel (%p1147) target = $region48
        $region47: #{tpu_custom_call.1} parent=31 // pred_region
          %s1151 = ssub.s32 256, 256
          %1152 = vsyncadd %s1143, %s1151
          %s1153 = smul.addr %s21, 2
          %s1154 = smul.addr %s1153, 128
          %s1155 = scalar_lea.hbm %s3, %s1154
          %s1156 = sshll.u32 %s1146, 4
          %s1157 = int_to_ptr.vmem [resolvable:$true] %s1156
          %1162 = dma.vmem_to_hbm [thread:$0]  %s1157, 256, %s1155, %s1143, 128, 128, 8
        $region48: #{tpu_custom_call.1} parent=31 // pred_fallthru
          _
      $region32: #{tpu_custom_call.1} parent=5 // pred_fallthru
        _
      %p1163 = scmp.le.s32.totalorder 2, %s16
      // Predicated region
      $region49: #{tpu_custom_call.1} parent=5 // pred_check
        %p1164 = pneg %p1163
      $region50: #{tpu_custom_call.1} parent=5 // pred_check_branch
        %1166 = sbr.rel (%p1164) target = $region52
      $region51: #{tpu_custom_call.1} parent=5 // pred_region
        %s1167 = ssub.s32 %s16, 2
        // Predicated region
        $region53: #{tpu_custom_call.1} parent=51 // pred_check
          %p1168 = pneg %p113
        $region54: #{tpu_custom_call.1} parent=51 // pred_check_branch
          %1170 = sbr.rel (%p1168) target = $region56
        $region55: #{tpu_custom_call.1} parent=51 // pred_region
          %s1171 = sand.u32 %s98, 1
          %s1172 = scalar_lea.sflag [#allocation4], %s1171
          %s1173 = sand.u32 %s98, 1
          %s1174 = smul.addr %s1173, 16
          %s1175 = scalar_lea.vmem [#allocation8], %s1174
          %1176 = dma.done %s1172, 256
        $region56: #{tpu_custom_call.1} parent=51 // pred_fallthru
          _
      $region52: #{tpu_custom_call.1} parent=5 // pred_fallthru
        _
    $region6: #{tpu_custom_call.1} parent=1 // loop_footer
      %s20 = sadd.s32 1, %s16
    $region7: #{tpu_custom_call.1} parent=1 // loop_footer_branch
      %15 = sbr.rel target = $region3
    $region8: #{tpu_custom_call.1} parent=1 // loop_exit
      _
    %1177 = vsyncpa [#allocation3], 1
    %s1178 = scalar_lea.sflag [#allocation3], 1
    %1179 = vsyncpa %s1178, 1
    %1180 = vsyncpa [#allocation6], 1
    %1181 = vsyncpa [#allocation4], 1
    %s1182 = scalar_lea.sflag [#allocation4], 1
    %1183 = vsyncpa %s1182, 1

</llo_original>
